<compile_context>
chip_gen: v7x
topology: tpu7x:2x2x1
jax: 0.10.0
libtpu: 0.0.40
codegen_flags: <defaults>
</compile_context>

<pallas_src>
import numpy as np
import jax
import jax.numpy as jnp
from jax.experimental import pallas as pl
from jax.experimental.pallas import tpu as pltpu


# ----------------------------------------------------------------------------
# Host-side setup identical to the torch module
# ----------------------------------------------------------------------------
def build_control_points(Hc, Wc):
    """Control-point grid exactly like TPSGridGen.__init__ (float32, (M, 2))."""
    xx, yy = np.meshgrid(np.linspace(-1, 1, Wc), np.linspace(-1, 1, Hc))
    return np.c_[xx.flatten(), yy.flatten()].astype(np.float32)


def build_tps_L_reference(Ho, Wo, control_pts):
    """Reference (N, M+3) L matrix, built exactly like the torch module."""
    xx, yy = np.meshgrid(np.linspace(-1, 1, Wo), np.linspace(-1, 1, Ho))
    grid = np.c_[xx.flatten(), yy.flatten()].astype(np.float64)
    cp = control_pts.astype(np.float64)
    diff = grid[:, None, :] - cp[None, :, :]
    Dx = np.sum(diff * diff, axis=-1)
    Dx = np.clip(Dx, 1e-08, None)
    Kp = np.log(Dx) * Dx
    return np.c_[Kp, np.ones((grid.shape[0], 1)), grid]      # (N, M+3) float64


# ----------------------------------------------------------------------------
# Pallas kernel: one lane-dense (2B, tn) output tile per grid step.
# The TPS basis for this tile is generated in-kernel (no L stream from HBM).
# ----------------------------------------------------------------------------
def _make_tps_kernel(Ho, Wo, M, tn):
    x_scale = 2.0 / max(Wo - 1, 1)
    y_scale = 2.0 / max(Ho - 1, 1)

    def kernel(w_ref, cp_ref, o_ref):
        # w_ref : (2B, M+3) stacked TPS params, row r = (batch r//2, coord r%2)
        # cp_ref: (M, 2)    control points (x, y)
        # o_ref : (2B, tn)  lane-dense output slab for this N-tile
        tile = pl.program_id(0)

        # Flattened output-grid index for this tile -> (x, y) in [-1, 1].
        n_idx = (jax.lax.broadcasted_iota(jnp.int32, (1, tn), 1)
                 + tile * tn).astype(jnp.float32)              # (1, tn)
        row_f = jnp.floor(n_idx / jnp.float32(Wo))             # grid row (y idx)
        col_f = n_idx - row_f * jnp.float32(Wo)                # grid col (x idx)
        x = col_f * x_scale - 1.0                              # (1, tn)
        y = row_f * y_scale - 1.0                              # (1, tn)

        # TPS radial basis r^2 * log(r^2) against the M control points.
        cp = cp_ref[...]                                       # (M, 2)
        dx = x - cp[:, 0:1]                                    # (M, tn)
        dy = y - cp[:, 1:2]                                    # (M, tn)
        d2 = jnp.maximum(dx * dx + dy * dy, 1e-8)              # clip like torch
        kp = d2 * jnp.log(d2)                                  # (M, tn), log->EUP

        w = w_ref[...]                                         # (2B, M+3)
        # RBF part on the MXU: (2B, M) @ (M, tn), K-contraction on the MXU.
        rbf = jnp.dot(w[:, :M], kp, preferred_element_type=jnp.float32)
        # Affine part (L columns [1, x, y]) directly on the VPU.
        aff = w[:, M:M + 1] + w[:, M + 1:M + 2] * x + w[:, M + 2:M + 3] * y
        o_ref[...] = rbf + aff                                 # unmasked vst

    return kernel


def tps_grid_gen(w_tps, control_pts, Ho, Wo, *, max_tile=2048):
    """w_tps: (B, M+3, 2) f32, control_pts: (M, 2) f32 -> (B, Ho, Wo, 2) f32."""
    B, K, two = w_tps.shape
    assert two == 2
    M = K - 3
    assert control_pts.shape == (M, 2)
    N = Ho * Wo
    assert N < (1 << 24)  # exact f32 index arithmetic inside the kernel

    # Collapse batch & coord onto the sublane axis -> one fused matmul whose
    # lane axis is N (lane-dense, contiguous output DMA).
    w_stacked = jnp.transpose(w_tps, (0, 2, 1)).reshape(2 * B, K)
    w_stacked = w_stacked.astype(jnp.float32)
    control_pts = control_pts.astype(jnp.float32)

    max_tile = max(128, (max_tile // 128) * 128)
    tn = N if N <= max_tile else max_tile      # tn is full-N or a mult. of 128
    n_tiles = pl.cdiv(N, tn)

    cost = pl.CostEstimate(
        flops=2 * (2 * B) * M * N + 8 * M * N + 6 * (2 * B) * N,
        transcendentals=M * N,
        bytes_accessed=4 * (w_stacked.size + control_pts.size + 2 * B * N),
    )

    out = pl.pallas_call(
        _make_tps_kernel(Ho, Wo, M, tn),
        out_shape=jax.ShapeDtypeStruct((2 * B, N), jnp.float32),
        grid_spec=pltpu.PrefetchScalarGridSpec(
            num_scalar_prefetch=0,
            grid=(n_tiles,),
            in_specs=[
                pl.BlockSpec((2 * B, K), lambda i: (0, 0)),   # resident params
                pl.BlockSpec((M, 2), lambda i: (0, 0)),       # resident ctrl pts
            ],
            out_specs=pl.BlockSpec((2 * B, tn), lambda i: (0, i)),
        ),
        compiler_params=pltpu.CompilerParams(
            dimension_semantics=("parallel",)),   # N tiles shard across TCs
        cost_estimate=cost,
    )(w_stacked, control_pts)

    # Layout plumbing back to the torch convention (B, Ho, Wo, 2).
    return out.reshape(B, 2, N).transpose(0, 2, 1).reshape(B, Ho, Wo, 2)


# ----------------------------------------------------------------------------
# Demo / self-check
# ----------------------------------------------------------------------------
if __name__ == "__main__":
    # Small shapes consistent with the module: B=2, 16x16 output grid,
    # 4x4 control-point grid -> M=16, K=19.
    B, Ho, Wo, Hc, Wc = 2, 16, 16, 4, 4
    M = Hc * Wc
    cp_np = build_control_points(Hc, Wc)

    key = jax.random.PRNGKey(0)
    w_tps = jax.random.normal(key, (B, M + 3, 2), dtype=jnp.float32)

    grid = tps_grid_gen(w_tps, jnp.asarray(cp_np), Ho, Wo)
    jax.block_until_ready(grid)
    assert grid.shape == (B, Ho, Wo, 2)

    # Reference: exactly the torch module's math (host-built L, plain matmul).
    L = build_tps_L_reference(Ho, Wo, cp_np)                        # (N, K) f64
    ref = np.einsum('nk,bkc->bnc', L, np.asarray(w_tps, dtype=np.float64))
    ref = ref.reshape(B, Ho, Wo, 2)
    err = np.max(np.abs(np.asarray(grid, dtype=np.float64) - ref))
    assert err < 1e-3, f"max abs error {err}"

    # Second check exercising the tiled (multi-grid-step) path: N=4096 > 2048.
    Ho2 = Wo2 = 64
    grid2 = tps_grid_gen(w_tps, jnp.asarray(cp_np), Ho2, Wo2)
    jax.block_until_ready(grid2)
    L2 = build_tps_L_reference(Ho2, Wo2, cp_np)
    ref2 = np.einsum('nk,bkc->bnc', L2, np.asarray(w_tps, dtype=np.float64))
    ref2 = ref2.reshape(B, Ho2, Wo2, 2)
    err2 = np.max(np.abs(np.asarray(grid2, dtype=np.float64) - ref2))
    assert err2 < 1e-3, f"max abs error (tiled path) {err2}"

    print("KERNEL_OK")
</pallas_src>

<mosaic_0001>
module attributes {stable_mosaic.version = 11 : i64} {
  func.func @kernel(%arg0: i32, %arg1: memref<4x19xf32, #tpu.memory_space<vmem>>, %arg2: memref<16x2xf32, #tpu.memory_space<vmem>>, %arg3: memref<4x256xf32, #tpu.memory_space<vmem>>) attributes {dimension_semantics = [#tpu.dimension_semantics<parallel>], iteration_bounds = array<i64: 1>, scalar_prefetch = 0 : i64, scratch_operands = 0 : i64, tpu.core_type = #tpu.core_type<tc>, window_params = [{pipeline_mode = #tpu.pipeline_mode<synchronous>, transform_indices = @transform_0, window_bounds = array<i64: 4, 19>}, {pipeline_mode = #tpu.pipeline_mode<synchronous>, transform_indices = @transform_1, window_bounds = array<i64: 16, 2>}, {transform_indices = @transform_2, window_bounds = array<i64: 4, 256>}]} {
    %0 = tpu.iota {dimensions = array<i32: 1>} : vector<1x256xi32>
    %c256_i32 = arith.constant 256 : i32
    %1 = arith.muli %arg0, %c256_i32 : i32
    %2 = vector.broadcast %1 : i32 to vector<1x256xi32>
    %3 = arith.addi %0, %2 : vector<1x256xi32>
    %4 = arith.sitofp %3 : vector<1x256xi32> to vector<1x256xf32>
    %cst = arith.constant 1.600000e+01 : f32
    %5 = vector.broadcast %cst : f32 to vector<1x256xf32>
    %6 = arith.divf %4, %5 : vector<1x256xf32>
    %7 = math.floor %6 : vector<1x256xf32>
    %cst_0 = arith.constant 1.600000e+01 : f32
    %8 = vector.broadcast %cst_0 : f32 to vector<1x256xf32>
    %9 = arith.mulf %7, %8 : vector<1x256xf32>
    %10 = arith.subf %4, %9 : vector<1x256xf32>
    %cst_1 = arith.constant 0.13333334 : f32
    %11 = vector.broadcast %cst_1 : f32 to vector<1x256xf32>
    %12 = arith.mulf %10, %11 : vector<1x256xf32>
    %cst_2 = arith.constant 1.000000e+00 : f32
    %13 = vector.broadcast %cst_2 : f32 to vector<1x256xf32>
    %14 = arith.subf %12, %13 : vector<1x256xf32>
    %cst_3 = arith.constant 0.13333334 : f32
    %15 = vector.broadcast %cst_3 : f32 to vector<1x256xf32>
    %16 = arith.mulf %7, %15 : vector<1x256xf32>
    %cst_4 = arith.constant 1.000000e+00 : f32
    %17 = vector.broadcast %cst_4 : f32 to vector<1x256xf32>
    %18 = arith.subf %16, %17 : vector<1x256xf32>
    %c0 = arith.constant 0 : index
    %c0_5 = arith.constant 0 : index
    %19 = vector.load %arg2[%c0, %c0_5] : memref<16x2xf32, #tpu.memory_space<vmem>>, vector<16x2xf32>
    %20 = vector.extract_strided_slice %19 {offsets = [0, 0], sizes = [16, 1], strides = [1, 1]} : vector<16x2xf32> to vector<16x1xf32>
    %21 = vector.broadcast %14 : vector<1x256xf32> to vector<16x256xf32>
    %22 = vector.broadcast %20 : vector<16x1xf32> to vector<16x256xf32>
    %23 = arith.subf %21, %22 : vector<16x256xf32>
    %24 = vector.extract_strided_slice %19 {offsets = [0, 1], sizes = [16, 1], strides = [1, 1]} : vector<16x2xf32> to vector<16x1xf32>
    %25 = vector.broadcast %18 : vector<1x256xf32> to vector<16x256xf32>
    %26 = vector.broadcast %24 : vector<16x1xf32> to vector<16x256xf32>
    %27 = arith.subf %25, %26 : vector<16x256xf32>
    %28 = arith.mulf %23, %23 : vector<16x256xf32>
    %29 = arith.mulf %27, %27 : vector<16x256xf32>
    %30 = arith.addf %28, %29 : vector<16x256xf32>
    %cst_6 = arith.constant 9.99999993E-9 : f32
    %31 = vector.broadcast %cst_6 : f32 to vector<16x256xf32>
    %32 = arith.maximumf %30, %31 : vector<16x256xf32>
    %33 = math.log %32 : vector<16x256xf32>
    %34 = arith.mulf %32, %33 : vector<16x256xf32>
    %c0_7 = arith.constant 0 : index
    %c0_8 = arith.constant 0 : index
    %35 = vector.load %arg1[%c0_7, %c0_8] : memref<4x19xf32, #tpu.memory_space<vmem>>, vector<4x19xf32>
    %36 = vector.extract_strided_slice %35 {offsets = [0, 0], sizes = [4, 16], strides = [1, 1]} : vector<4x19xf32> to vector<4x16xf32>
    %cst_9 = arith.constant dense<0.000000e+00> : vector<4x256xf32>
    %37 = tpu.matmul %36, %34, %cst_9 {dimension_numbers = #tpu.dot_dimension_numbers<[1], [0], [0], [1], [0, 0, 1, 1], [], []>} : vector<4x16xf32>, vector<16x256xf32>, vector<4x256xf32> -> vector<4x256xf32>
    %38 = vector.extract_strided_slice %35 {offsets = [0, 16], sizes = [4, 1], strides = [1, 1]} : vector<4x19xf32> to vector<4x1xf32>
    %39 = vector.extract_strided_slice %35 {offsets = [0, 17], sizes = [4, 1], strides = [1, 1]} : vector<4x19xf32> to vector<4x1xf32>
    %40 = vector.broadcast %39 : vector<4x1xf32> to vector<4x256xf32>
    %41 = vector.broadcast %14 : vector<1x256xf32> to vector<4x256xf32>
    %42 = arith.mulf %40, %41 : vector<4x256xf32>
    %43 = vector.broadcast %38 : vector<4x1xf32> to vector<4x256xf32>
    %44 = arith.addf %43, %42 : vector<4x256xf32>
    %45 = vector.extract_strided_slice %35 {offsets = [0, 18], sizes = [4, 1], strides = [1, 1]} : vector<4x19xf32> to vector<4x1xf32>
    %46 = vector.broadcast %45 : vector<4x1xf32> to vector<4x256xf32>
    %47 = vector.broadcast %18 : vector<1x256xf32> to vector<4x256xf32>
    %48 = arith.mulf %46, %47 : vector<4x256xf32>
    %49 = arith.addf %44, %48 : vector<4x256xf32>
    %50 = arith.addf %37, %49 : vector<4x256xf32>
    %c0_10 = arith.constant 0 : index
    %c0_11 = arith.constant 0 : index
    %51 = vector.load %arg3[%c0_10, %c0_11] : memref<4x256xf32, #tpu.memory_space<vmem>>, vector<4x256xf32>
    tpu.vector_store %arg3[%c0_10, %c0_11], %50 {strides = array<i32>} : memref<4x256xf32, #tpu.memory_space<vmem>>, vector<4x256xf32>,
    return
  }
  func.func @transform_0(%arg0: i32) -> (i32, i32) {
    %c0_i32 = arith.constant 0 : i32
    %c0_i32_0 = arith.constant 0 : i32
    %c0_i32_1 = arith.constant 0 : i32
    return %c0_i32, %c0_i32_0 : i32, i32
  }
  func.func @transform_1(%arg0: i32) -> (i32, i32) {
    %c0_i32 = arith.constant 0 : i32
    %c0_i32_0 = arith.constant 0 : i32
    %c0_i32_1 = arith.constant 0 : i32
    return %c0_i32, %c0_i32_0 : i32, i32
  }
  func.func @transform_2(%arg0: i32) -> (i32, i32) {
    %c0_i32 = arith.constant 0 : i32
    %c0_i32_0 = arith.constant 0 : i32
    return %c0_i32, %arg0 : i32, i32
  }
}

</mosaic_0001>

<llo_original>
// kernel: tpu_custom_call.1
$region0: #{tpu_custom_call.1}
  #allocation0 [shape = 'u32[]', space=smem, size = 0x4, offset = 0x4, fixed_abs, tag = 'smem constant byte address 0x4 - core index']
  #allocation1 [shape = 'u32[144,128]{1,0:T(1,128)}', space=vmem, size = 0x12000, scoped, tag = 'internal scratch']
  %s0 = inlined_call_operand.vmem [shape: f32[4,19], index: 0, kind: input, shape index: {}]
  %s1 = inlined_call_operand.vmem [shape: f32[16,2], index: 1, kind: input, shape index: {}]
  %s2 = inlined_call_operand.hbm [shape: f32[4,256], index: 2, kind: output, shape index: {}]
  %s3 = sld [smem:[#allocation0]]
  $region18: #{tpu_custom_call.1} parent=0
    _
  %s5 = ssub.s32 1, %s3
  %s6 = scalar_select 0, %s5, %s3
  $region1: #{tpu_custom_call.1} parent=0
    #allocation2 [shape = 'u8[4096]{0}', space=vmem, size = 0x1000, scoped, tag = 'output window, operand 0, single buffered']
    #allocation3 [shape = 's32[1]{0}', space=sflag, size = 0x4, scoped, tag = 'scoped memory for tpu_custom_call.1']
    %7 = vsyncpa [#allocation3], 0
    // Predicated region
    $region2: #{tpu_custom_call.1} parent=1 // pred_check
      _
    $region3: #{tpu_custom_call.1} parent=1 // pred_check_branch
      %9 = sbr.rel (0) target = $region5
    $region4: #{tpu_custom_call.1} parent=1 // pred_region
      _
    $region5: #{tpu_custom_call.1} parent=1 // pred_fallthru
      _
    // Predicated region
    $region6: #{tpu_custom_call.1} parent=1 // pred_check
      _
    $region7: #{tpu_custom_call.1} parent=1 // pred_check_branch
      %11 = sbr.rel (0) target = $region9
    $region8: #{tpu_custom_call.1} parent=1 // pred_region
      _
    $region9: #{tpu_custom_call.1} parent=1 // pred_fallthru
      _
    %v12 = vlaneseq
    %v13 = vand.u32 %v12, 127
    %v14 = vadd.s32 %v13, 128
    %s15 = smul.u32 0, 256
    %v16 = vstv %s15
    %v17 = vadd.s32 %v13, %v16
    %v18 = vadd.s32 %v14, %v16
    %v19 = vcvt.s32.f32 %v17
    %v20 = vcvt.s32.f32 %v18
    %v21 = vrcp.pop 16.0
    %v22 = vmul.f32 %v19, %v21
    %v23 = vmul.f32 %v20, %v21
    %v24 = vfloor.f32 %v22
    %v25 = vfloor.f32 %v23
    %v26 = vmul.f32 %v24, 16.0
    %v27 = vmul.f32 %v25, 16.0
    %v28 = vsub.f32 %v19, %v26
    %v29 = vsub.f32 %v20, %v27
    %v30 = vmul.f32 %v28, 0.13333334
    %v31 = vmul.f32 %v29, 0.13333334
    %v32 = vsub.f32 %v30, 1.0
    %v33 = vsub.f32 %v31, 1.0
    %v34 = vmul.f32 %v24, 0.13333334
    %v35 = vmul.f32 %v25, 0.13333334
    %v36 = vsub.f32 %v34, 1.0
    %v37 = vsub.f32 %v35, 1.0
    %v38 = vld [vmem:[%s1] sm:$0xff]
    %v39 = vld [vmem:[%s1 + $0x8] sm:$0xff]
    %41 = vset.pattern.permute.xlu0 0
    %42 = vperm.xlu0 %41, %v38
    %v43 = vpop.permute.xlu0 %42
    %46 = vset.pattern.permute.xlu0 0
    %47 = vperm.xlu0 %46, %v39
    %v48 = vpop.permute.xlu0 %47
    %v50 = vsub.f32 %v32, %v43
    %v51 = vsub.f32 %v33, %v43
    %v52 = vsub.f32 %v32, %v48
    %v53 = vsub.f32 %v33, %v48
    %54 = vset.pattern.permute.xlu0 1
    %55 = vperm.xlu0 %54, %v38
    %v56 = vpop.permute.xlu0 %55
    %58 = vset.pattern.permute.xlu0 1
    %59 = vperm.xlu0 %58, %v39
    %v60 = vpop.permute.xlu0 %59
    %v62 = vsub.f32 %v36, %v56
    %v63 = vsub.f32 %v37, %v56
    %v64 = vsub.f32 %v36, %v60
    %v65 = vsub.f32 %v37, %v60
    %v66 = vmul.f32 %v50, %v50
    %v67 = vmul.f32 %v51, %v51
    %v68 = vmul.f32 %v52, %v52
    %v69 = vmul.f32 %v53, %v53
    %v70 = vmul.f32 %v62, %v62
    %v71 = vmul.f32 %v63, %v63
    %v72 = vmul.f32 %v64, %v64
    %v73 = vmul.f32 %v65, %v65
    %v74 = vadd.f32 %v66, %v70
    %v75 = vadd.f32 %v67, %v71
    %v76 = vadd.f32 %v68, %v72
    %v77 = vadd.f32 %v69, %v73
    %v78 = vmax.f32 %v74, 1e-08
    %v79 = vmax.f32 %v75, 1e-08
    %v80 = vmax.f32 %v76, 1e-08
    %v81 = vmax.f32 %v77, 1e-08
    %v82 = vlog2.pop %v78
    %v83 = vmul.f32 %v82, 0.6931472
    %v84 = vlog2.pop %v79
    %v85 = vmul.f32 %v84, 0.6931472
    %v86 = vlog2.pop %v80
    %v87 = vmul.f32 %v86, 0.6931472
    %v88 = vlog2.pop %v81
    %v89 = vmul.f32 %v88, 0.6931472
    %v90 = vmul.f32 %v78, %v83
    %v91 = vmul.f32 %v79, %v85
    %v92 = vmul.f32 %v80, %v87
    %v93 = vmul.f32 %v81, %v89
    %v94 = vld [vmem:[%s0] sm:$0xf]
    %96 = vset.pattern.permute.xlu0 17
    %97 = vperm.xlu0 %96, %v94
    %v98 = vpop.permute.xlu0 %97
    %v100 = vmul.f32 %v98, %v32
    %v101 = vmul.f32 %v98, %v33
    %102 = vset.pattern.permute.xlu0 16
    %103 = vperm.xlu0 %102, %v94
    %v104 = vpop.permute.xlu0 %103
    %v106 = vadd.f32 %v104, %v100
    %v107 = vadd.f32 %v104, %v101
    %108 = vset.pattern.permute.xlu0 18
    %109 = vperm.xlu0 %108, %v94
    %v110 = vpop.permute.xlu0 %109
    %v112 = vmul.f32 %v110, %v36
    %v113 = vmul.f32 %v110, %v37
    %v114 = vadd.f32 %v106, %v112
    %v115 = vadd.f32 %v107, %v113
    %vm116 = vcmask 130048
    %v117 = vsel %vm116, %v94, 0
    %119 = vmatprep.subr.mxu0 %v91
    %120 = vmatpush1.msra.mxu0 %v90
    %121 = vmatprep.subr.mxu0 %v93
    %122 = vmatpush1.msra.mxu0 %v92
    %123 = vmatprep.subr.mxu0 0.0
    %124 = vmatpush1.msra.mxu0 0.0
    %125 = vmatprep.subr.mxu0 0.0
    %126 = vmatpush1.msra.mxu0 0.0
    %127 = vmatprep.subr.mxu0 0.0
    %128 = vmatpush1.msra.mxu0 0.0
    %129 = vmatprep.subr.mxu0 0.0
    %130 = vmatpush1.msra.mxu0 0.0
    %131 = vmatprep.subr.mxu0 0.0
    %132 = vmatpush1.msra.mxu0 0.0
    %133 = vmatprep.subr.mxu0 0.0
    %134 = vmatpush1.msra.mxu0 0.0
    %135 = vmatprep.subr.mxu0 0.0
    %136 = vmatpush1.msra.mxu0 0.0
    %137 = vmatprep.subr.mxu0 0.0
    %138 = vmatpush1.msra.mxu0 0.0
    %139 = vmatprep.subr.mxu0 0.0
    %140 = vmatpush1.msra.mxu0 0.0
    %141 = vmatprep.subr.mxu0 0.0
    %142 = vmatpush1.msra.mxu0 0.0
    %143 = vmatprep.subr.mxu0 0.0
    %144 = vmatpush1.msra.mxu0 0.0
    %145 = vmatprep.subr.mxu0 0.0
    %146 = vmatpush1.msra.mxu0 0.0
    %147 = vmatprep.subr.mxu0 0.0
    %148 = vmatpush1.msra.mxu0 0.0
    %149 = vmatprep.subr.mxu0 0.0
    %150 = vmatpush1.msra.mxu0 0.0
    %151 = vmatprep.subr.mxu0 0.0
    %152 = vmatpush1.msra.mxu0 0.0
    %153 = vmatprep.subr.mxu0 0.0
    %154 = vmatpush1.msra.mxu0 0.0
    %155 = vmatprep.subr.mxu0 0.0
    %156 = vmatpush1.msra.mxu0 0.0
    %157 = vmatprep.subr.mxu0 0.0
    %158 = vmatpush1.msra.mxu0 0.0
    %159 = vmatprep.subr.mxu0 0.0
    %160 = vmatpush1.msra.mxu0 0.0
    %161 = vmatprep.subr.mxu0 0.0
    %162 = vmatpush1.msra.mxu0 0.0
    %163 = vmatprep.subr.mxu0 0.0
    %164 = vmatpush1.msra.mxu0 0.0
    %165 = vmatprep.subr.mxu0 0.0
    %166 = vmatpush1.msra.mxu0 0.0
    %167 = vmatprep.subr.mxu0 0.0
    %168 = vmatpush1.msra.mxu0 0.0
    %169 = vmatprep.subr.mxu0 0.0
    %170 = vmatpush1.msra.mxu0 0.0
    %171 = vmatprep.subr.mxu0 0.0
    %172 = vmatpush1.msra.mxu0 0.0
    %173 = vmatprep.subr.mxu0 0.0
    %174 = vmatpush1.msra.mxu0 0.0
    %175 = vmatprep.subr.mxu0 0.0
    %176 = vmatpush1.msra.mxu0 0.0
    %177 = vmatprep.subr.mxu0 0.0
    %178 = vmatpush1.msra.mxu0 0.0
    %179 = vmatprep.subr.mxu0 0.0
    %180 = vmatpush1.msra.mxu0 0.0
    %181 = vmatprep.subr.mxu0 0.0
    %182 = vmatpush1.msra.mxu0 0.0
    %183 = vmatprep.mubr.f32.mxu0 0.0
    %184 = vmatmul.mubr.f32.gmra.mrb[0].mxu0 %v117
    %v185 = vpop.f32.mrb[0].mxu0
    %v186 = vadd.f32 %v114, %v185
    %v187 = vpop.f32.mrb[0].mxu0
    %v188 = vadd.f32 %v115, %v187
    %189 = vdwg.mxu0
    %v192 = vcombine.low %v186, %v188
    %194 = vst [vmem:[#allocation2] sm:$0xff] %v192
    // Predicated region
    $region10: #{tpu_custom_call.1} parent=1 // pred_check
      _
    $region11: #{tpu_custom_call.1} parent=1 // pred_check_branch
      %196 = sbr.rel (0) target = $region13
    $region12: #{tpu_custom_call.1} parent=1 // pred_region
      %s198 = ssub.s32 128, 128
      %199 = vsyncadd [#allocation3], %s198
      %s201 = sshll.u32 [#allocation2], 4
      %s202 = int_to_ptr.vmem [resolvable:$true] %s201
      %204 = dma.vmem_to_hbm [thread:$0]  %s202, 128, %s2, [#allocation3]
    $region13: #{tpu_custom_call.1} parent=1 // pred_fallthru
      _
    // Predicated region
    $region14: #{tpu_custom_call.1} parent=1 // pred_check
      _
    $region15: #{tpu_custom_call.1} parent=1 // pred_check_branch
      %206 = sbr.rel (0) target = $region17
    $region16: #{tpu_custom_call.1} parent=1 // pred_region
      %207 = dma.done [#allocation3], 128
    $region17: #{tpu_custom_call.1} parent=1 // pred_fallthru
      _
    %208 = vsyncpa [#allocation3], 1

</llo_original>
